<compile_context>
chip_gen: v6e
topology: v6e:2x2x1
jax: 0.10.0
libtpu: 0.0.40
codegen_flags: <defaults>
</compile_context>

<pallas_src>
import jax
import jax.numpy as jnp
from jax.experimental import pallas as pl
from jax.experimental.pallas import tpu as pltpu


def _round_up(n, m):
    return ((n + m - 1) // m) * m


def _scam_kernel(x_ref, w_ref, b_ref, o_ref):
    # x_ref: [TB, D] f32 (VMEM, streamed per grid step)
    # w_ref: [1, D]  f32 (VMEM, resident — constant index_map)
    # b_ref: [1, 1]  f32 (SMEM scalar)
    # o_ref: [TB, 1] f32 (VMEM)
    z = jnp.sum(x_ref[...] * w_ref[...], axis=-1, keepdims=True)  # VPU + XLU
    z = z + b_ref[0, 0]                 # scalar bias add from SMEM
    o_ref[...] = jax.nn.sigmoid(z)      # exp / reciprocal go to the EUP


def scam_classifier(x, weight, bias, *, block_b=512):
    """Forward pass of ScamClassifier: sigmoid(x @ W.T + b).

    x:      [B, D] float32
    weight: [1, D] float32  (PyTorch nn.Linear(D, 1) weight layout)
    bias:   [1]    float32
    returns [B, 1] float32
    """
    B, D = x.shape
    x = x.astype(jnp.float32)

    # Batch tile: multiple of 8 (sublane), capped at block_b, and further
    # capped so that the double-buffered x tile (2 * TB * D * 4B) plus the
    # resident weight row stays comfortably under ~8 MiB of scoped VMEM even
    # for large feature dims.
    vmem_budget = 8 * 1024 * 1024
    tb_cap = max(8, (vmem_budget // (2 * 4 * max(D, 1))) // 8 * 8)
    TB = min(block_b, tb_cap, _round_up(B, 8))
    B_pad = _round_up(B, TB)
    if B_pad != B:
        x = jnp.pad(x, ((0, B_pad - B), (0, 0)))

    w_row = weight.reshape(1, D).astype(jnp.float32)   # [1, D], no transpose
    b2d = bias.reshape(1, 1).astype(jnp.float32)       # [1, 1] scalar for SMEM

    out = pl.pallas_call(
        _scam_kernel,
        out_shape=jax.ShapeDtypeStruct((B_pad, 1), jnp.float32),
        grid_spec=pltpu.PrefetchScalarGridSpec(
            num_scalar_prefetch=0,
            grid=(B_pad // TB,),
            in_specs=[
                pl.BlockSpec((TB, D), lambda i: (i, 0)),            # x tile
                pl.BlockSpec((1, D), lambda i: (0, 0)),             # weight row
                pl.BlockSpec(memory_space=pltpu.MemorySpace.SMEM),  # bias scalar
            ],
            out_specs=pl.BlockSpec((TB, 1), lambda i: (i, 0)),
        ),
        compiler_params=pltpu.CompilerParams(
            dimension_semantics=("parallel",),   # batch rows are independent
        ),
    )(x, w_row, b2d)
    # TODO(synk): for extremely large D (tens of thousands), add a trailing
    # "arbitrary" feature-axis with a VMEM accumulator (pl.when init/finalize)
    # instead of shrinking the batch tile.
    return out[:B]


if __name__ == "__main__":
    key = jax.random.PRNGKey(0)
    kx, kw, kb, kx2 = jax.random.split(key, 4)

    B, D = 8, 32  # batch=8, input_dim=32 (matches nn.Linear(input_dim, 1))

    x = jax.random.normal(kx, (B, D), dtype=jnp.float32)
    # Deterministic "init" of nn.Linear(D, 1) parameters (synthetic).
    bound = 1.0 / jnp.sqrt(jnp.float32(D))
    weight = jax.random.uniform(kw, (1, D), minval=-bound, maxval=bound,
                                dtype=jnp.float32)
    bias = jax.random.uniform(kb, (1,), minval=-bound, maxval=bound,
                              dtype=jnp.float32)

    out = scam_classifier(x, weight, bias)
    out = jax.block_until_ready(out)
    ref = jax.nn.sigmoid(x @ weight.T + bias)
    assert out.shape == (B, 1)
    assert jnp.allclose(out, ref, atol=1e-5), (out, ref)

    # Second check: non-multiple batch with multi-tile grid (exercises the
    # batch tiling + padding path).
    B2 = 200
    x2 = jax.random.normal(kx2, (B2, D), dtype=jnp.float32)
    out2 = jax.block_until_ready(scam_classifier(x2, weight, bias, block_b=64))
    ref2 = jax.nn.sigmoid(x2 @ weight.T + bias)
    assert out2.shape == (B2, 1)
    assert jnp.allclose(out2, ref2, atol=1e-5)

    print("KERNEL_OK")
</pallas_src>

<mosaic_0001>
module attributes {stable_mosaic.version = 11 : i64} {
  func.func @_scam_kernel(%arg0: i32, %arg1: memref<8x32xf32, #tpu.memory_space<vmem>>, %arg2: memref<1x32xf32, #tpu.memory_space<vmem>>, %arg3: memref<1x1xf32, #tpu.memory_space<smem>>, %arg4: memref<8x1xf32, #tpu.memory_space<vmem>>) attributes {dimension_semantics = [#tpu.dimension_semantics<parallel>], iteration_bounds = array<i64: 1>, scalar_prefetch = 0 : i64, scratch_operands = 0 : i64, tpu.core_type = #tpu.core_type<tc>, window_params = [{transform_indices = @transform_0, window_bounds = array<i64: 8, 32>}, {pipeline_mode = #tpu.pipeline_mode<synchronous>, transform_indices = @transform_1, window_bounds = array<i64: 1, 32>}, {transform_indices = @transform_2, window_bounds = array<i64: 1, 1>}, {transform_indices = @transform_3, window_bounds = array<i64: 8, 1>}]} {
    %c0 = arith.constant 0 : index
    %c0_0 = arith.constant 0 : index
    %0 = vector.load %arg1[%c0, %c0_0] : memref<8x32xf32, #tpu.memory_space<vmem>>, vector<8x32xf32>
    %c0_1 = arith.constant 0 : index
    %c0_2 = arith.constant 0 : index
    %1 = vector.load %arg2[%c0_1, %c0_2] : memref<1x32xf32, #tpu.memory_space<vmem>>, vector<1x32xf32>
    %2 = vector.broadcast %1 : vector<1x32xf32> to vector<8x32xf32>
    %3 = arith.mulf %0, %2 : vector<8x32xf32>
    %cst = arith.constant dense<0.000000e+00> : vector<8xf32>
    %4 = vector.multi_reduction <add>, %3, %cst [1] : vector<8x32xf32> to vector<8xf32>
    %5 = vector.shape_cast %4 : vector<8xf32> to vector<8x1xf32>
    %c0_3 = arith.constant 0 : index
    %c0_4 = arith.constant 0 : index
    %6 = memref.load %arg3[%c0_3, %c0_4] : memref<1x1xf32, #tpu.memory_space<smem>>
    %7 = vector.broadcast %6 : f32 to vector<8x1xf32>
    %8 = arith.addf %5, %7 : vector<8x1xf32>
    %9 = arith.negf %8 : vector<8x1xf32>
    %10 = math.exp %9 : vector<8x1xf32>
    %cst_5 = arith.constant 1.000000e+00 : f32
    %11 = vector.broadcast %cst_5 : f32 to vector<8x1xf32>
    %12 = arith.addf %11, %10 : vector<8x1xf32>
    %13 = arith.divf %11, %12 : vector<8x1xf32>
    %c0_6 = arith.constant 0 : index
    %c0_7 = arith.constant 0 : index
    %14 = vector.load %arg4[%c0_6, %c0_7] : memref<8x1xf32, #tpu.memory_space<vmem>>, vector<8x1xf32>
    tpu.vector_store %arg4[%c0_6, %c0_7], %13 {strides = array<i32>} : memref<8x1xf32, #tpu.memory_space<vmem>>, vector<8x1xf32>,
    return
  }
  func.func @transform_0(%arg0: i32) -> (i32, i32) {
    %c0_i32 = arith.constant 0 : i32
    %c0_i32_0 = arith.constant 0 : i32
    return %arg0, %c0_i32 : i32, i32
  }
  func.func @transform_1(%arg0: i32) -> (i32, i32) {
    %c0_i32 = arith.constant 0 : i32
    %c0_i32_0 = arith.constant 0 : i32
    %c0_i32_1 = arith.constant 0 : i32
    return %c0_i32, %c0_i32_0 : i32, i32
  }
  func.func @transform_2(%arg0: i32) -> (i32, i32) {
    %c0_i32 = arith.constant 0 : i32
    %c0_i32_0 = arith.constant 0 : i32
    %c0_i32_1 = arith.constant 0 : i32
    return %c0_i32, %c0_i32_0 : i32, i32
  }
  func.func @transform_3(%arg0: i32) -> (i32, i32) {
    %c0_i32 = arith.constant 0 : i32
    %c0_i32_0 = arith.constant 0 : i32
    return %arg0, %c0_i32 : i32, i32
  }
}

</mosaic_0001>

<llo_original>
// kernel: tpu_custom_call.1
$region0: #{tpu_custom_call.1}
  #allocation0 [shape = 'u32[]', space=smem, size = 0x4, offset = 0x4, fixed_abs, tag = 'smem constant byte address 0x4 - core index']
  #allocation1 [shape = 'u32[144,128]{1,0:T(1,128)}', space=vmem, size = 0x12000, scoped, tag = 'internal scratch']
  #allocation2 [shape = 'f32[1,1]{1,0:T(1,128)S(6)}', space=smem, size = 0x200, scoped, tag = 'scoped memory for tpu_custom_call.1']
  %s0 = inlined_call_operand.hbm [shape: f32[8,32], index: 0, kind: input, shape index: {}]
  %s1 = inlined_call_operand.vmem [shape: f32[1,32], index: 1, kind: input, shape index: {}]
  %s2 = inlined_call_operand.<no memory space> [shape: f32[1,1], index: 2, kind: input, shape index: {}]
  %s3 = inlined_call_operand.vmem [shape: f32[8,1], index: 3, kind: output, shape index: {}]
  %s4 = sld [smem:[#allocation0]]
  $region26: #{tpu_custom_call.1} parent=0
    _
  %s6 = ssub.s32 1, %s4
  %s7 = scalar_select 0, %s6, %s4
  %8 = sst [smem:[#allocation2]] %s2
  $region1: #{tpu_custom_call.1} parent=0
    #allocation3 [shape = 'u8[4096]{0}', space=vmem, size = 0x1000, scoped, tag = 'input window, operand 0, single buffered']
    #allocation4 [shape = 's32[1]{0}', space=sflag, size = 0x4, scoped, tag = 'scoped memory for tpu_custom_call.1']
    %9 = vsyncpa [#allocation4], 0
    // Predicated region
    $region2: #{tpu_custom_call.1} parent=1 // pred_check
      _
    $region3: #{tpu_custom_call.1} parent=1 // pred_check_branch
      %11 = sbr.rel (0) target = $region5
    $region4: #{tpu_custom_call.1} parent=1 // pred_region
      %s13 = ssub.s32 128, 128
      %14 = vsyncadd [#allocation4], %s13
      %s16 = sshll.u32 [#allocation3], 4
      %s17 = int_to_ptr.vmem [resolvable:$true] %s16
      %19 = dma.hbm_to_vmem [thread:$0]  %s0, 128, %s17, [#allocation4]
    $region5: #{tpu_custom_call.1} parent=1 // pred_fallthru
      _
    // Predicated region
    $region6: #{tpu_custom_call.1} parent=1 // pred_check
      _
    $region7: #{tpu_custom_call.1} parent=1 // pred_check_branch
      %21 = sbr.rel (0) target = $region9
    $region8: #{tpu_custom_call.1} parent=1 // pred_region
      _
    $region9: #{tpu_custom_call.1} parent=1 // pred_fallthru
      _
    // Predicated region
    $region10: #{tpu_custom_call.1} parent=1 // pred_check
      _
    $region11: #{tpu_custom_call.1} parent=1 // pred_check_branch
      %23 = sbr.rel (0) target = $region13
    $region12: #{tpu_custom_call.1} parent=1 // pred_region
      _
    $region13: #{tpu_custom_call.1} parent=1 // pred_fallthru
      _
    // Predicated region
    $region14: #{tpu_custom_call.1} parent=1 // pred_check
      _
    $region15: #{tpu_custom_call.1} parent=1 // pred_check_branch
      %25 = sbr.rel (0) target = $region17
    $region16: #{tpu_custom_call.1} parent=1 // pred_region
      %26 = dma.done [#allocation4], 128
    $region17: #{tpu_custom_call.1} parent=1 // pred_fallthru
      _
    %v27 = vld [vmem:[#allocation3] sm:$0xff]
    %v28 = vld [vmem:[%s1] sm:$0x1]
    %v30 = vlaneseq
    %v31 = vshrl.u32 %v30, 7
    %v32 = vsub.s32 0, %v31
    %v33 = vrot.slane %v28, %v32
    %v35 = vmul.f32 %v27, %v33
    %vm36 = vcmask 261120
    %v37 = vsel %vm36, %v35, 0.0
    %38 = vadd.xlane.f32.xlu0 %v37
    %v39 = vpop.xlane.xlu0 %38
    %s40 = sld [smem:[#allocation2]]
    %v41 = vstv %s40
    %v42 = vadd.f32 %v39, %v41
    %v43 = vxor.u32 %v42, 2147483648
    %v44 = vmul.f32 %v43, 1.442695
    %v45 = vpow.pop %v44
    %v46 = vadd.f32 %v45, 1.0
    %v47 = vrcp.pop %v46
    %v48 = vmul.f32 1.0, %v47
    %vm49 = vcmask 7168
    %50 = vst.msk [vmem:[%s3] sm:$0xff] %vm49, %v48
    // Predicated region
    $region18: #{tpu_custom_call.1} parent=1 // pred_check
      _
    $region19: #{tpu_custom_call.1} parent=1 // pred_check_branch
      %52 = sbr.rel (0) target = $region21
    $region20: #{tpu_custom_call.1} parent=1 // pred_region
      _
    $region21: #{tpu_custom_call.1} parent=1 // pred_fallthru
      _
    // Predicated region
    $region22: #{tpu_custom_call.1} parent=1 // pred_check
      _
    $region23: #{tpu_custom_call.1} parent=1 // pred_check_branch
      %54 = sbr.rel (0) target = $region25
    $region24: #{tpu_custom_call.1} parent=1 // pred_region
      _
    $region25: #{tpu_custom_call.1} parent=1 // pred_fallthru
      _
    %55 = vsyncpa [#allocation4], 1

</llo_original>
